<compile_context>
chip_gen: v6e
topology: v6e:2x2x1
jax: 0.10.0
libtpu: 0.0.40
codegen_flags: <defaults>
</compile_context>

<pallas_src>
import functools

import numpy as np
import jax
import jax.numpy as jnp
from jax.experimental import pallas as pl
from jax.experimental.pallas import tpu as pltpu

_EPS = 1e-6            # F.pairwise_distance default eps (added to the difference)
_LANE = 128
_SUBLANE = 8

# Conservative VMEM budget for the double-buffered input blocks:
#   2 inputs x 2 pipeline buffers x TB x TD x itemsize  <=  _VMEM_BUDGET.
# 24 MiB keeps headroom under the 32 MiB scoped limit requested below, which is
# safe on every generation (v5e/v6e: 128 MiB physical VMEM, v7x: only 64 MiB).
_VMEM_BUDGET = 24 * 1024 * 1024
_VMEM_LIMIT = 32 * 1024 * 1024


def _round_up(x, m):
    return ((x + m - 1) // m) * m


def _choose_tiles(B, D, itemsize):
    """Pick (TB, TD): batch-tile (sublanes) / feature-tile (lanes) sizes."""

    def fits(tb, td):
        return 2 * 2 * tb * td * itemsize <= _VMEM_BUDGET

    b_pad = _round_up(B, _SUBLANE)
    # Prefer keeping the whole feature dim in a single block (no reduction axis)
    # and pick the biggest batch tile that fits the budget — bigger tiles give
    # better DMA/compute overlap for this HBM-bandwidth-bound kernel.
    for tb in (512, 256, 128, 64, 32, 16, 8):
        if tb <= b_pad and fits(tb, D):
            return tb, D
    # Feature dim too large for one block: also tile D (lane-aligned) and reduce
    # over it with a trailing grid axis.
    for tb in (256, 128, 64, 32, 16, 8):
        if tb > b_pad:
            continue
        td = (_VMEM_BUDGET // (4 * tb * itemsize)) // _LANE * _LANE
        if td >= _LANE:
            return tb, min(td, _round_up(D, _LANE))
    return _SUBLANE, _LANE


def _pairwise_distance_kernel(e1_ref, e2_ref, dist_ref, *, d_valid, d_tile, need_d_mask):
    """One (TB, TD) tile: accumulate sum((x1 - x2 + eps)^2) over the feature axis."""
    k = pl.program_id(1)                       # feature (reduction) grid axis

    @pl.when(k == 0)
    def _init():
        dist_ref[...] = jnp.zeros_like(dist_ref)

    # Cast inside the kernel so bf16 embeddings can be streamed from HBM at half
    # the bandwidth cost (the cast is also required on v5e, whose VPU has no bf16).
    diff = e1_ref[...].astype(jnp.float32) - e2_ref[...].astype(jnp.float32) + _EPS
    sq = diff * diff
    if need_d_mask:
        # Zero contributions of feature-padding columns (padded zeros would
        # otherwise each contribute eps^2 to the sum).
        col = jax.lax.broadcasted_iota(jnp.int32, sq.shape, 1) + k * d_tile
        sq = jnp.where(col < d_valid, sq, 0.0)

    # Per-row partial sum of squares; the output block index is constant along
    # the k axis, so this block stays resident in VMEM (pure VMEM accumulate).
    dist_ref[...] += jnp.sum(sq, axis=-1, keepdims=True)

    @pl.when(k == pl.num_programs(1) - 1)
    def _finalize():
        dist_ref[...] = jnp.sqrt(dist_ref[...])


def pairwise_distance(embeddings1, embeddings2, *, tb=None, td=None):
    """Row-wise L2 distance, matching torch.nn.functional.pairwise_distance(p=2)."""
    assert embeddings1.shape == embeddings2.shape and embeddings1.ndim == 2
    B, D = embeddings1.shape
    itemsize = jnp.dtype(embeddings1.dtype).itemsize
    TB, TD = _choose_tiles(B, D, itemsize)
    if tb is not None:
        TB = tb
    if td is not None:
        TD = td
    B_pad, D_pad = _round_up(B, TB), _round_up(D, TD)
    nb, nd = B_pad // TB, D_pad // TD

    if (B_pad, D_pad) != (B, D):
        pad = ((0, B_pad - B), (0, D_pad - D))
        embeddings1 = jnp.pad(embeddings1, pad)
        embeddings2 = jnp.pad(embeddings2, pad)

    kernel = functools.partial(
        _pairwise_distance_kernel,
        d_valid=D, d_tile=TD, need_d_mask=(D_pad != D))

    # TODO(synk): the output is a (TB, 1) column (masked narrow store).  Making
    # it lane-dense (B on lanes) needs either a sublane->lane relayout or an MXU
    # ones-matvec at reduced f32 precision; since output traffic is <1% of the
    # input HBM traffic here, the exact, relayout-free form is kept.
    out = pl.pallas_call(
        kernel,
        out_shape=jax.ShapeDtypeStruct((B_pad, 1), jnp.float32),
        grid=(nb, nd),
        in_specs=[
            pl.BlockSpec((TB, TD), lambda i, k: (i, k)),
            pl.BlockSpec((TB, TD), lambda i, k: (i, k)),
        ],
        out_specs=pl.BlockSpec((TB, 1), lambda i, k: (i, 0)),
        compiler_params=pltpu.CompilerParams(
            # batch axis -> "parallel" (shards across v7x's two TensorCores;
            # harmless no-op on single-core v5e/v6e), feature axis -> reduction.
            dimension_semantics=("parallel", "arbitrary"),
            vmem_limit_bytes=_VMEM_LIMIT,
        ),
    )(embeddings1, embeddings2)
    return out[:B, 0]


def contrastive_loss(embeddings1, embeddings2, labels, margin=2.0, hard_mining=True):
    """Mirrors ContrastiveLoss.forward.

    `labels` must be host-visible: the PyTorch module uses data-dependent Python
    control flow (`.any()`, `.item()`, dynamic top-k size), which cannot be traced.
    """
    distances = pairwise_distance(embeddings1, embeddings2)   # [B] float32

    # TODO(synk): the static parts of this epilogue (masked partial sums, the
    # non-hard-mining quadratic loss) could be fused into the kernel as scalar
    # accumulators; kept as O(B) JAX glue because the dynamic-k top-k and the
    # label-dependent branches need concrete labels on the host anyway.
    labels_np = np.asarray(labels)

    if hard_mining:
        pos_mask_np = labels_np == 1
        neg_mask_np = labels_np == 0

        if pos_mask_np.any():
            # mean over ALL B elements (matches the PyTorch code exactly)
            pos_loss = jnp.mean(distances * jnp.asarray(pos_mask_np, jnp.float32))
        else:
            pos_loss = jnp.float32(0.0)

        if neg_mask_np.any():
            # NOTE: multiplying by the mask leaves zeros at positive positions and
            # the k-smallest top-k can pick those zeros — this faithfully mirrors
            # the PyTorch original.
            neg_distances = distances * jnp.asarray(neg_mask_np, jnp.float32)
            k = max(1, int(0.3 * int(neg_mask_np.sum())))
            hardest_negatives = -jax.lax.top_k(-neg_distances, k)[0]   # k smallest values
            neg_loss = jnp.mean(jax.nn.relu(margin - hardest_negatives))
        else:
            neg_loss = jnp.float32(0.0)

        return pos_loss + neg_loss
    else:
        labels_f = jnp.asarray(labels_np, jnp.float32)
        loss = labels_f * distances ** 2 + (1.0 - labels_f) * jax.nn.relu(margin - distances) ** 2
        return jnp.mean(loss)


def _reference_loss(e1, e2, labels, margin=2.0, hard_mining=True):
    """Pure numpy reference mirroring the PyTorch code, for a sanity check."""
    e1 = np.asarray(e1, np.float32)
    e2 = np.asarray(e2, np.float32)
    labels = np.asarray(labels)
    d = np.sqrt(np.sum((e1 - e2 + _EPS) ** 2, axis=-1))
    if hard_mining:
        pos = labels == 1
        neg = labels == 0
        pos_loss = (d * pos.astype(np.float32)).mean() if pos.any() else 0.0
        if neg.any():
            nd = d * neg.astype(np.float32)
            k = max(1, int(0.3 * int(neg.sum())))
            hardest = np.sort(nd)[:k]
            neg_loss = np.maximum(margin - hardest, 0.0).mean()
        else:
            neg_loss = 0.0
        return pos_loss + neg_loss
    else:
        lf = labels.astype(np.float32)
        loss = lf * d ** 2 + (1 - lf) * np.maximum(margin - d, 0.0) ** 2
        return loss.mean()


if __name__ == "__main__":
    key = jax.random.PRNGKey(0)
    k1, k2, k3 = jax.random.split(key, 3)

    # Small shapes consistent with the module: a batch of embedding pairs + labels.
    B, D = 8, 32
    embeddings1 = jax.random.normal(k1, (B, D), dtype=jnp.float32)
    embeddings2 = jax.random.normal(k2, (B, D), dtype=jnp.float32)
    labels = jax.random.bernoulli(k3, 0.5, (B,)).astype(jnp.int32)

    for hard in (True, False):
        loss = contrastive_loss(embeddings1, embeddings2, labels, margin=2.0, hard_mining=hard)
        loss = jax.block_until_ready(loss)
        ref = _reference_loss(embeddings1, embeddings2, labels, margin=2.0, hard_mining=hard)
        assert np.allclose(np.asarray(loss), ref, rtol=1e-5, atol=1e-5), (hard, loss, ref)

    # Also exercise the batch-tiled / feature-tiled (reduction-axis) code path,
    # including padding + in-kernel lane masking, at a small forced tile size.
    B2, D2 = 20, 200
    k4, k5 = jax.random.split(k3)
    f1 = jax.random.normal(k4, (B2, D2), dtype=jnp.float32)
    f2 = jax.random.normal(k5, (B2, D2), dtype=jnp.float32)
    d_kernel = jax.block_until_ready(pairwise_distance(f1, f2, tb=16, td=128))
    d_ref = np.sqrt(np.sum((np.asarray(f1) - np.asarray(f2) + _EPS) ** 2, axis=-1))
    assert np.allclose(np.asarray(d_kernel), d_ref, rtol=1e-5, atol=1e-5)

    print("KERNEL_OK")
</pallas_src>

<mosaic_0001>
module attributes {stable_mosaic.version = 11 : i64} {
  func.func @_pairwise_distance_kernel(%arg0: i32, %arg1: i32, %arg2: memref<8x32xf32, #tpu.memory_space<vmem>>, %arg3: memref<8x32xf32, #tpu.memory_space<vmem>>, %arg4: memref<8x1xf32, #tpu.memory_space<vmem>>) attributes {dimension_semantics = [#tpu.dimension_semantics<parallel>, #tpu.dimension_semantics<arbitrary>], iteration_bounds = array<i64: 1, 1>, scalar_prefetch = 0 : i64, scratch_operands = 0 : i64, tpu.core_type = #tpu.core_type<tc>, window_params = [{transform_indices = @transform_0, window_bounds = array<i64: 8, 32>}, {transform_indices = @transform_1, window_bounds = array<i64: 8, 32>}, {transform_indices = @transform_2, window_bounds = array<i64: 8, 1>}]} {
    %c0_i32 = arith.constant 0 : i32
    %0 = arith.cmpi eq, %arg1, %c0_i32 : i32
    %1 = arith.extui %0 : i1 to i32
    %c0_i32_0 = arith.constant 0 : i32
    %2 = arith.cmpi ne, %1, %c0_i32_0 : i32
    scf.if %2 {
      %cst_11 = arith.constant 0.000000e+00 : f32
      %17 = vector.broadcast %cst_11 : f32 to vector<8x1xf32>
      %c0_12 = arith.constant 0 : index
      %c0_13 = arith.constant 0 : index
      %18 = vector.load %arg4[%c0_12, %c0_13] : memref<8x1xf32, #tpu.memory_space<vmem>>, vector<8x1xf32>
      tpu.vector_store %arg4[%c0_12, %c0_13], %17 {strides = array<i32>} : memref<8x1xf32, #tpu.memory_space<vmem>>, vector<8x1xf32>,
    } else {
    }
    %c0 = arith.constant 0 : index
    %c0_1 = arith.constant 0 : index
    %3 = vector.load %arg2[%c0, %c0_1] : memref<8x32xf32, #tpu.memory_space<vmem>>, vector<8x32xf32>
    %c0_2 = arith.constant 0 : index
    %c0_3 = arith.constant 0 : index
    %4 = vector.load %arg3[%c0_2, %c0_3] : memref<8x32xf32, #tpu.memory_space<vmem>>, vector<8x32xf32>
    %5 = arith.subf %3, %4 : vector<8x32xf32>
    %cst = arith.constant 9.99999997E-7 : f32
    %6 = vector.broadcast %cst : f32 to vector<8x32xf32>
    %7 = arith.addf %5, %6 : vector<8x32xf32>
    %8 = arith.mulf %7, %7 : vector<8x32xf32>
    %c0_4 = arith.constant 0 : index
    %c0_5 = arith.constant 0 : index
    %9 = vector.load %arg4[%c0_4, %c0_5] : memref<8x1xf32, #tpu.memory_space<vmem>>, vector<8x1xf32>
    %cst_6 = arith.constant dense<0.000000e+00> : vector<8xf32>
    %10 = vector.multi_reduction <add>, %8, %cst_6 [1] : vector<8x32xf32> to vector<8xf32>
    %11 = vector.shape_cast %10 : vector<8xf32> to vector<8x1xf32>
    %12 = arith.addf %9, %11 : vector<8x1xf32>
    %c0_7 = arith.constant 0 : index
    %c0_8 = arith.constant 0 : index
    %13 = vector.load %arg4[%c0_7, %c0_8] : memref<8x1xf32, #tpu.memory_space<vmem>>, vector<8x1xf32>
    tpu.vector_store %arg4[%c0_7, %c0_8], %12 {strides = array<i32>} : memref<8x1xf32, #tpu.memory_space<vmem>>, vector<8x1xf32>,
    %c0_i32_9 = arith.constant 0 : i32
    %14 = arith.cmpi eq, %arg1, %c0_i32_9 : i32
    %15 = arith.extui %14 : i1 to i32
    %c0_i32_10 = arith.constant 0 : i32
    %16 = arith.cmpi ne, %15, %c0_i32_10 : i32
    scf.if %16 {
      %c0_11 = arith.constant 0 : index
      %c0_12 = arith.constant 0 : index
      %17 = vector.load %arg4[%c0_11, %c0_12] : memref<8x1xf32, #tpu.memory_space<vmem>>, vector<8x1xf32>
      %18 = math.sqrt %17 : vector<8x1xf32>
      %c0_13 = arith.constant 0 : index
      %c0_14 = arith.constant 0 : index
      %19 = vector.load %arg4[%c0_13, %c0_14] : memref<8x1xf32, #tpu.memory_space<vmem>>, vector<8x1xf32>
      tpu.vector_store %arg4[%c0_13, %c0_14], %18 {strides = array<i32>} : memref<8x1xf32, #tpu.memory_space<vmem>>, vector<8x1xf32>,
    } else {
    }
    return
  }
  func.func @transform_0(%arg0: i32, %arg1: i32) -> (i32, i32) {
    %c0_i32 = arith.constant 0 : i32
    return %arg0, %arg1 : i32, i32
  }
  func.func @transform_1(%arg0: i32, %arg1: i32) -> (i32, i32) {
    %c0_i32 = arith.constant 0 : i32
    return %arg0, %arg1 : i32, i32
  }
  func.func @transform_2(%arg0: i32, %arg1: i32) -> (i32, i32) {
    %c0_i32 = arith.constant 0 : i32
    %c0_i32_0 = arith.constant 0 : i32
    return %arg0, %c0_i32 : i32, i32
  }
}

</mosaic_0001>

<llo_original>
// kernel: tpu_custom_call.1
$region0: #{tpu_custom_call.1}
  #allocation0 [shape = 'u32[]', space=smem, size = 0x4, offset = 0x4, fixed_abs, tag = 'smem constant byte address 0x4 - core index']
  #allocation1 [shape = 'u32[144,128]{1,0:T(1,128)}', space=vmem, size = 0x12000, scoped, tag = 'internal scratch']
  %s0 = inlined_call_operand.hbm [shape: f32[8,32], index: 0, kind: input, shape index: {}]
  %s1 = inlined_call_operand.hbm [shape: f32[8,32], index: 1, kind: input, shape index: {}]
  %s2 = inlined_call_operand.vmem [shape: f32[8,1], index: 2, kind: output, shape index: {}]
  %s3 = sld [smem:[#allocation0]]
  $region34: #{tpu_custom_call.1} parent=0
    _
  %s5 = ssub.s32 1, %s3
  %s6 = scalar_select 0, %s5, %s3
  $region1: #{tpu_custom_call.1} parent=0
    #allocation2 [shape = 'u8[4096]{0}', space=vmem, size = 0x1000, scoped, tag = 'input window, operand 0, single buffered']
    #allocation3 [shape = 's32[1]{0}', space=sflag, size = 0x4, scoped, tag = 'scoped memory for tpu_custom_call.1']
    #allocation4 [shape = 'u8[4096]{0}', space=vmem, size = 0x1000, scoped, tag = 'input window, operand 1, single buffered']
    #allocation5 [shape = 's32[1]{0}', space=sflag, size = 0x4, scoped, tag = 'scoped memory for tpu_custom_call.1']
    %7 = vsyncpa [#allocation3], 0
    %8 = vsyncpa [#allocation5], 0
    // Predicated region
    $region2: #{tpu_custom_call.1} parent=1 // pred_check
      _
    $region3: #{tpu_custom_call.1} parent=1 // pred_check_branch
      %10 = sbr.rel (0) target = $region5
    $region4: #{tpu_custom_call.1} parent=1 // pred_region
      %s12 = ssub.s32 128, 128
      %13 = vsyncadd [#allocation3], %s12
      %s15 = sshll.u32 [#allocation2], 4
      %s16 = int_to_ptr.vmem [resolvable:$true] %s15
      %18 = dma.hbm_to_vmem [thread:$0]  %s0, 128, %s16, [#allocation3]
    $region5: #{tpu_custom_call.1} parent=1 // pred_fallthru
      _
    // Predicated region
    $region6: #{tpu_custom_call.1} parent=1 // pred_check
      _
    $region7: #{tpu_custom_call.1} parent=1 // pred_check_branch
      %20 = sbr.rel (0) target = $region9
    $region8: #{tpu_custom_call.1} parent=1 // pred_region
      %s22 = ssub.s32 128, 128
      %23 = vsyncadd [#allocation5], %s22
      %s25 = sshll.u32 [#allocation4], 4
      %s26 = int_to_ptr.vmem [resolvable:$true] %s25
      %28 = dma.hbm_to_vmem [thread:$0]  %s1, 128, %s26, [#allocation5]
    $region9: #{tpu_custom_call.1} parent=1 // pred_fallthru
      _
    // Predicated region
    $region10: #{tpu_custom_call.1} parent=1 // pred_check
      _
    $region11: #{tpu_custom_call.1} parent=1 // pred_check_branch
      %30 = sbr.rel (0) target = $region13
    $region12: #{tpu_custom_call.1} parent=1 // pred_region
      %31 = dma.done [#allocation3], 128
    $region13: #{tpu_custom_call.1} parent=1 // pred_fallthru
      _
    // Predicated region
    $region14: #{tpu_custom_call.1} parent=1 // pred_check
      _
    $region15: #{tpu_custom_call.1} parent=1 // pred_check_branch
      %33 = sbr.rel (0) target = $region17
    $region16: #{tpu_custom_call.1} parent=1 // pred_region
      %34 = dma.done [#allocation5], 128
    $region17: #{tpu_custom_call.1} parent=1 // pred_fallthru
      _
    %p35 = scmp.eq.s32.totalorder 0, 0
    // Predicated region
    $region18: #{tpu_custom_call.1} parent=1 // pred_check
      %p36 = pneg %p35
    $region19: #{tpu_custom_call.1} parent=1 // pred_check_branch
      %38 = sbr.rel (%p36) target = $region21
    $region20: #{tpu_custom_call.1} parent=1 // pred_region
      %vm39 = vcmask 7168
      %40 = vst.msk [vmem:[%s2] sm:$0xff] %vm39, 0.0
    $region21: #{tpu_custom_call.1} parent=1 // pred_fallthru
      _
    %v41 = vld [vmem:[#allocation2] sm:$0xff]
    %v42 = vld [vmem:[#allocation4] sm:$0xff]
    %v43 = vsub.f32 %v41, %v42
    %v44 = vadd.f32 %v43, 1e-06
    %v45 = vmul.f32 %v44, %v44
    %v46 = vld [vmem:[%s2] sm:$0xff]
    %vm47 = vcmask 261120
    %v48 = vsel %vm47, %v45, 0.0
    %49 = vadd.xlane.f32.xlu0 %v48
    %v50 = vpop.xlane.xlu0 %49
    %v51 = vadd.f32 %v46, %v50
    %vm52 = vcmask 7168
    %53 = vst.msk [vmem:[%s2] sm:$0xff] %vm52, %v51
    // Predicated region
    $region22: #{tpu_custom_call.1} parent=1 // pred_check
      %p54 = pneg %p35
    $region23: #{tpu_custom_call.1} parent=1 // pred_check_branch
      %56 = sbr.rel (%p54) target = $region25
    $region24: #{tpu_custom_call.1} parent=1 // pred_region
      %v57 = vld [vmem:[%s2] sm:$0xff]
      %v58 = vrsqrt.pop %v57
      %v59 = vmul.f32 %v57, %v58
      %vm60 = vcmp.eq.f32.partialorder %v57, inf
      %v61 = vsel %vm60, %v57, %v59
      %vm62 = vcmp.eq.f32.partialorder %v57, 0.0
      %v63 = vand.u32 %v57, 2147483648
      %v64 = vsel %vm62, %v63, %v61
      %65 = vst.msk [vmem:[%s2] sm:$0xff] %vm52, %v64
    $region25: #{tpu_custom_call.1} parent=1 // pred_fallthru
      _
    // Predicated region
    $region26: #{tpu_custom_call.1} parent=1 // pred_check
      _
    $region27: #{tpu_custom_call.1} parent=1 // pred_check_branch
      %67 = sbr.rel (0) target = $region29
    $region28: #{tpu_custom_call.1} parent=1 // pred_region
      _
    $region29: #{tpu_custom_call.1} parent=1 // pred_fallthru
      _
    // Predicated region
    $region30: #{tpu_custom_call.1} parent=1 // pred_check
      _
    $region31: #{tpu_custom_call.1} parent=1 // pred_check_branch
      %69 = sbr.rel (0) target = $region33
    $region32: #{tpu_custom_call.1} parent=1 // pred_region
      _
    $region33: #{tpu_custom_call.1} parent=1 // pred_fallthru
      _
    %70 = vsyncpa [#allocation3], 1
    %71 = vsyncpa [#allocation5], 1

</llo_original>
